<compile_context>
chip_gen: v6e
topology: v6e:2x2x1
jax: 0.10.0
libtpu: 0.0.40
codegen_flags: <defaults>
</compile_context>

<pallas_src>
import functools

import jax
import jax.numpy as jnp
from jax.experimental import pallas as pl
from jax.experimental.pallas import tpu as pltpu


def _cp_pred_kernel(w_ref, rhsw_ref, out_ref):
    # w_ref:    (Bp, R)      pre-multiplied query embeddings (grid-invariant block)
    # rhsw_ref: (tile_n, R)  tile of the rhs embedding table
    # out_ref:  (Bp, tile_n) tile of the score matrix
    out_ref[...] = jax.lax.dot_general(
        w_ref[...],
        rhsw_ref[...],
        dimension_numbers=(((1,), (1,)), ((), ())),   # contract last dims, no transpose
        preferred_element_type=jnp.float32,           # f32 accumulation on the MXU
    ).astype(out_ref.dtype)


def _round_up(x, m):
    return -(-x // m) * m


@functools.partial(jax.jit, static_argnames=("tile_n", "table_dtype"))
def cp_pred_pallas(w, rhs_weight, *, tile_n=2048, table_dtype=jnp.bfloat16):
    """pred = w @ rhs_weight.T via Pallas, tiled over the entity dimension N.

    w:          (B, R) f32  pre-multiplied (lhs * rel) query embeddings
    rhs_weight: (N, R) f32  full rhs embedding table
    returns     (B, N) f32
    """
    B, R = w.shape
    N, R2 = rhs_weight.shape
    assert R == R2

    # Pad batch to a sublane multiple of 8 (cheap; keeps layouts dense).
    Bp = max(8, _round_up(B, 8))
    if Bp != B:
        w = jnp.pad(w, ((0, Bp - B), (0, 0)))

    # Tile over N: multiple of 256 (v6e/v7x MXU width), capped at padded N.
    tile_n = max(256, (int(tile_n) // 256) * 256)
    tile_n = min(tile_n, _round_up(N, 256))

    grid_n = pl.cdiv(N, tile_n)
    n_pad = grid_n * tile_n
    if n_pad != N:
        rhs_weight = jnp.pad(rhs_weight, ((0, n_pad - N), (0, 0)))

    # Cast the streamed operands (bf16 by default); accumulation stays f32.
    w_c = w.astype(table_dtype)
    rhs_c = rhs_weight.astype(table_dtype)

    # Explicit VMEM budget: double-buffered rhs tile + output tile + query block,
    # plus headroom.  Sized so it also fits v7x (64 MiB physical / 32 MiB default).
    itm = jnp.dtype(table_dtype).itemsize
    vmem_bytes = (
        2 * tile_n * R * itm          # rhs table tile, double-buffered
        + 2 * Bp * tile_n * 4         # output tile, double-buffered
        + 2 * Bp * R * itm            # query block
        + (4 << 20)                   # headroom
    )
    vmem_limit = int(min(max(vmem_bytes, 16 << 20), 48 << 20))

    out = pl.pallas_call(
        _cp_pred_kernel,
        out_shape=jax.ShapeDtypeStruct((Bp, n_pad), jnp.float32),
        grid_spec=pltpu.PrefetchScalarGridSpec(
            num_scalar_prefetch=0,
            grid=(grid_n,),
            in_specs=[
                pl.BlockSpec((Bp, R), lambda j: (0, 0)),        # premultiplied queries
                pl.BlockSpec((tile_n, R), lambda j: (j, 0)),    # rhs table tile
            ],
            out_specs=pl.BlockSpec((Bp, tile_n), lambda j: (0, j)),
        ),
        compiler_params=pltpu.CompilerParams(
            dimension_semantics=("parallel",),   # entity axis is embarrassingly parallel
            vmem_limit_bytes=vmem_limit,
        ),
    )(w_c, rhs_c)

    return out[:B, :N]


def cp_forward(x, lhs_weight, rel_weight, rhs_weight, *,
               tile_n=2048, table_dtype=jnp.bfloat16):
    """Reproduces CP.forward(x) -> (pred, (lhs, rel, rhs))."""
    # Embedding lookups (glue, plain JAX gather).
    # Note: these could be folded into the kernel with num_scalar_prefetch=1 and
    # pl.Element row-gather BlockSpecs; the win is small at tiny batch sizes.
    lhs = lhs_weight[x[:, 0]]
    rel = rel_weight[x[:, 1]]
    rhs = rhs_weight[x[:, 2]]
    # Hoisted, grid-invariant Hadamard product (computed once, not per tile).
    w = lhs * rel
    pred = cp_pred_pallas(w, rhs_weight, tile_n=tile_n, table_dtype=table_dtype)
    return pred, (lhs, rel, rhs)


if __name__ == "__main__":
    # Small, TPU-friendly sizes consistent with the module; n_ent deliberately
    # NOT a multiple of the tile so the cdiv/padding path is exercised.
    n_ent, n_rel, rank = 1000, 16, 128
    init_size = 0.001
    batch = 8

    key = jax.random.PRNGKey(0)
    k_lhs, k_rel, k_rhs, k_q = jax.random.split(key, 4)

    # torch.nn.Embedding default init is N(0, 1); module scales by init_size.
    lhs_weight = jax.random.normal(k_lhs, (n_ent, rank), jnp.float32) * init_size
    rel_weight = jax.random.normal(k_rel, (n_rel, rank), jnp.float32) * init_size
    rhs_weight = jax.random.normal(k_rhs, (n_ent, rank), jnp.float32) * init_size

    # Query triples (lhs_idx, rel_idx, rhs_idx), shape (B, 3), int32.
    ks0, ks1, ks2 = jax.random.split(k_q, 3)
    x = jnp.stack(
        [
            jax.random.randint(ks0, (batch,), 0, n_ent),
            jax.random.randint(ks1, (batch,), 0, n_rel),
            jax.random.randint(ks2, (batch,), 0, n_ent),
        ],
        axis=1,
    ).astype(jnp.int32)

    hi = jax.lax.Precision.HIGHEST
    w_ref = lhs_weight[x[:, 0]] * rel_weight[x[:, 1]]

    # --- f32 path: exact module semantics ---
    pred_f32, (lhs, rel, rhs) = cp_forward(
        x, lhs_weight, rel_weight, rhs_weight, table_dtype=jnp.float32
    )
    jax.block_until_ready(pred_f32)
    ref_f32 = jnp.einsum("br,nr->bn", w_ref, rhs_weight, precision=hi)
    assert pred_f32.shape == (batch, n_ent)
    assert jnp.allclose(pred_f32, ref_f32, atol=1e-9, rtol=2e-2)
    assert jnp.allclose(lhs, lhs_weight[x[:, 0]])
    assert jnp.allclose(rel, rel_weight[x[:, 1]])
    assert jnp.allclose(rhs, rhs_weight[x[:, 2]])

    # --- bf16-streaming path (default perf config): compare against a reference
    # computed on the same bf16-rounded operands (accumulation stays f32). ---
    pred_bf16, _ = cp_forward(x, lhs_weight, rel_weight, rhs_weight)
    jax.block_until_ready(pred_bf16)
    w_b = w_ref.astype(jnp.bfloat16).astype(jnp.float32)
    rhs_b = rhs_weight.astype(jnp.bfloat16).astype(jnp.float32)
    ref_bf16 = jnp.einsum("br,nr->bn", w_b, rhs_b, precision=hi)
    assert pred_bf16.shape == (batch, n_ent)
    assert jnp.allclose(pred_bf16, ref_bf16, atol=1e-9, rtol=2e-2)

    print("KERNEL_OK")
</pallas_src>

<mosaic_0001>
module attributes {stable_mosaic.version = 11 : i64} {
  func.func @_cp_pred_kernel(%arg0: i32, %arg1: memref<8x128xf32, #tpu.memory_space<vmem>>, %arg2: memref<1024x128xf32, #tpu.memory_space<vmem>>, %arg3: memref<8x1024xf32, #tpu.memory_space<vmem>>) attributes {dimension_semantics = [#tpu.dimension_semantics<parallel>], iteration_bounds = array<i64: 1>, scalar_prefetch = 0 : i64, scratch_operands = 0 : i64, tpu.core_type = #tpu.core_type<tc>, window_params = [{pipeline_mode = #tpu.pipeline_mode<synchronous>, transform_indices = @transform_0, window_bounds = array<i64: 8, 128>}, {transform_indices = @transform_1, window_bounds = array<i64: 1024, 128>}, {transform_indices = @transform_2, window_bounds = array<i64: 8, 1024>}]} {
    %c0 = arith.constant 0 : index
    %c0_0 = arith.constant 0 : index
    %0 = vector.load %arg1[%c0, %c0_0] : memref<8x128xf32, #tpu.memory_space<vmem>>, vector<8x128xf32>
    %c0_1 = arith.constant 0 : index
    %c0_2 = arith.constant 0 : index
    %1 = vector.load %arg2[%c0_1, %c0_2] : memref<1024x128xf32, #tpu.memory_space<vmem>>, vector<1024x128xf32>
    %cst = arith.constant dense<0.000000e+00> : vector<8x1024xf32>
    %2 = tpu.matmul %0, %1, %cst {dimension_numbers = #tpu.dot_dimension_numbers<[1], [1], [0], [0], [0, 0, 1, 0], [], []>} : vector<8x128xf32>, vector<1024x128xf32>, vector<8x1024xf32> -> vector<8x1024xf32>
    %c0_3 = arith.constant 0 : index
    %c0_4 = arith.constant 0 : index
    %3 = vector.load %arg3[%c0_3, %c0_4] : memref<8x1024xf32, #tpu.memory_space<vmem>>, vector<8x1024xf32>
    tpu.vector_store %arg3[%c0_3, %c0_4], %2 {strides = array<i32>} : memref<8x1024xf32, #tpu.memory_space<vmem>>, vector<8x1024xf32>,
    return
  }
  func.func @transform_0(%arg0: i32) -> (i32, i32) {
    %c0_i32 = arith.constant 0 : i32
    %c0_i32_0 = arith.constant 0 : i32
    %c0_i32_1 = arith.constant 0 : i32
    return %c0_i32, %c0_i32_0 : i32, i32
  }
  func.func @transform_1(%arg0: i32) -> (i32, i32) {
    %c0_i32 = arith.constant 0 : i32
    %c0_i32_0 = arith.constant 0 : i32
    return %arg0, %c0_i32 : i32, i32
  }
  func.func @transform_2(%arg0: i32) -> (i32, i32) {
    %c0_i32 = arith.constant 0 : i32
    %c0_i32_0 = arith.constant 0 : i32
    return %c0_i32, %arg0 : i32, i32
  }
}

</mosaic_0001>

<llo_original>
// kernel: cp_pred_pallas.1
$region0: #{cp_pred_pallas.1}
  #allocation0 [shape = 'u32[]', space=smem, size = 0x4, offset = 0x4, fixed_abs, tag = 'smem constant byte address 0x4 - core index']
  #allocation1 [shape = 'u32[144,128]{1,0:T(1,128)}', space=vmem, size = 0x12000, scoped, tag = 'internal scratch']
  %s0 = inlined_call_operand.vmem [shape: f32[8,128], index: 0, kind: input, shape index: {}]
  %s1 = inlined_call_operand.vmem [shape: f32[1024,128], index: 1, kind: input, shape index: {}]
  %s2 = inlined_call_operand.hbm [shape: f32[8,1024], index: 2, kind: output, shape index: {}]
  %s3 = sld [smem:[#allocation0]]
  $region18: #{cp_pred_pallas.1} parent=0
    _
  %s5 = ssub.s32 1, %s3
  %s6 = scalar_select 0, %s5, %s3
  $region1: #{cp_pred_pallas.1} parent=0
    #allocation2 [shape = 'u8[32768]{0}', space=vmem, size = 0x8000, scoped, tag = 'output window, operand 0, single buffered']
    #allocation3 [shape = 's32[1]{0}', space=sflag, size = 0x4, scoped, tag = 'scoped memory for cp_pred_pallas.1']
    %7 = vsyncpa [#allocation3], 0
    // Predicated region
    $region2: #{cp_pred_pallas.1} parent=1 // pred_check
      _
    $region3: #{cp_pred_pallas.1} parent=1 // pred_check_branch
      %9 = sbr.rel (0) target = $region5
    $region4: #{cp_pred_pallas.1} parent=1 // pred_region
      _
    $region5: #{cp_pred_pallas.1} parent=1 // pred_fallthru
      _
    // Predicated region
    $region6: #{cp_pred_pallas.1} parent=1 // pred_check
      _
    $region7: #{cp_pred_pallas.1} parent=1 // pred_check_branch
      %11 = sbr.rel (0) target = $region9
    $region8: #{cp_pred_pallas.1} parent=1 // pred_region
      _
    $region9: #{cp_pred_pallas.1} parent=1 // pred_fallthru
      _
    %v12 = vld [vmem:[%s0] sm:$0xff]
    %v13 = vld [vmem:[%s1] sm:$0xff]
    %v14 = vld [vmem:[%s1 + $0x8] sm:$0xff]
    %v15 = vld [vmem:[%s1 + $0x10] sm:$0xff]
    %v16 = vld [vmem:[%s1 + $0x18] sm:$0xff]
    %v17 = vld [vmem:[%s1 + $0x20] sm:$0xff]
    %v18 = vld [vmem:[%s1 + $0x28] sm:$0xff]
    %v19 = vld [vmem:[%s1 + $0x30] sm:$0xff]
    %v20 = vld [vmem:[%s1 + $0x38] sm:$0xff]
    %v21 = vld [vmem:[%s1 + $0x40] sm:$0xff]
    %v22 = vld [vmem:[%s1 + $0x48] sm:$0xff]
    %v23 = vld [vmem:[%s1 + $0x50] sm:$0xff]
    %v24 = vld [vmem:[%s1 + $0x58] sm:$0xff]
    %v25 = vld [vmem:[%s1 + $0x60] sm:$0xff]
    %v26 = vld [vmem:[%s1 + $0x68] sm:$0xff]
    %v27 = vld [vmem:[%s1 + $0x70] sm:$0xff]
    %v28 = vld [vmem:[%s1 + $0x78] sm:$0xff]
    %v29 = vld [vmem:[%s1 + $0x80] sm:$0xff]
    %v30 = vld [vmem:[%s1 + $0x88] sm:$0xff]
    %v31 = vld [vmem:[%s1 + $0x90] sm:$0xff]
    %v32 = vld [vmem:[%s1 + $0x98] sm:$0xff]
    %v33 = vld [vmem:[%s1 + $0xa0] sm:$0xff]
    %v34 = vld [vmem:[%s1 + $0xa8] sm:$0xff]
    %v35 = vld [vmem:[%s1 + $0xb0] sm:$0xff]
    %v36 = vld [vmem:[%s1 + $0xb8] sm:$0xff]
    %v37 = vld [vmem:[%s1 + $0xc0] sm:$0xff]
    %v38 = vld [vmem:[%s1 + $0xc8] sm:$0xff]
    %v39 = vld [vmem:[%s1 + $0xd0] sm:$0xff]
    %v40 = vld [vmem:[%s1 + $0xd8] sm:$0xff]
    %v41 = vld [vmem:[%s1 + $0xe0] sm:$0xff]
    %v42 = vld [vmem:[%s1 + $0xe8] sm:$0xff]
    %v43 = vld [vmem:[%s1 + $0xf0] sm:$0xff]
    %v44 = vld [vmem:[%s1 + $0xf8] sm:$0xff]
    %v45 = vld [vmem:[%s1 + $0x100] sm:$0xff]
    %v46 = vld [vmem:[%s1 + $0x108] sm:$0xff]
    %v47 = vld [vmem:[%s1 + $0x110] sm:$0xff]
    %v48 = vld [vmem:[%s1 + $0x118] sm:$0xff]
    %v49 = vld [vmem:[%s1 + $0x120] sm:$0xff]
    %v50 = vld [vmem:[%s1 + $0x128] sm:$0xff]
    %v51 = vld [vmem:[%s1 + $0x130] sm:$0xff]
    %v52 = vld [vmem:[%s1 + $0x138] sm:$0xff]
    %v53 = vld [vmem:[%s1 + $0x140] sm:$0xff]
    %v54 = vld [vmem:[%s1 + $0x148] sm:$0xff]
    %v55 = vld [vmem:[%s1 + $0x150] sm:$0xff]
    %v56 = vld [vmem:[%s1 + $0x158] sm:$0xff]
    %v57 = vld [vmem:[%s1 + $0x160] sm:$0xff]
    %v58 = vld [vmem:[%s1 + $0x168] sm:$0xff]
    %v59 = vld [vmem:[%s1 + $0x170] sm:$0xff]
    %v60 = vld [vmem:[%s1 + $0x178] sm:$0xff]
    %v61 = vld [vmem:[%s1 + $0x180] sm:$0xff]
    %v62 = vld [vmem:[%s1 + $0x188] sm:$0xff]
    %v63 = vld [vmem:[%s1 + $0x190] sm:$0xff]
    %v64 = vld [vmem:[%s1 + $0x198] sm:$0xff]
    %v65 = vld [vmem:[%s1 + $0x1a0] sm:$0xff]
    %v66 = vld [vmem:[%s1 + $0x1a8] sm:$0xff]
    %v67 = vld [vmem:[%s1 + $0x1b0] sm:$0xff]
    %v68 = vld [vmem:[%s1 + $0x1b8] sm:$0xff]
    %v69 = vld [vmem:[%s1 + $0x1c0] sm:$0xff]
    %v70 = vld [vmem:[%s1 + $0x1c8] sm:$0xff]
    %v71 = vld [vmem:[%s1 + $0x1d0] sm:$0xff]
    %v72 = vld [vmem:[%s1 + $0x1d8] sm:$0xff]
    %v73 = vld [vmem:[%s1 + $0x1e0] sm:$0xff]
    %v74 = vld [vmem:[%s1 + $0x1e8] sm:$0xff]
    %v75 = vld [vmem:[%s1 + $0x1f0] sm:$0xff]
    %v76 = vld [vmem:[%s1 + $0x1f8] sm:$0xff]
    %v77 = vld [vmem:[%s1 + $0x200] sm:$0xff]
    %v78 = vld [vmem:[%s1 + $0x208] sm:$0xff]
    %v79 = vld [vmem:[%s1 + $0x210] sm:$0xff]
    %v80 = vld [vmem:[%s1 + $0x218] sm:$0xff]
    %v81 = vld [vmem:[%s1 + $0x220] sm:$0xff]
    %v82 = vld [vmem:[%s1 + $0x228] sm:$0xff]
    %v83 = vld [vmem:[%s1 + $0x230] sm:$0xff]
    %v84 = vld [vmem:[%s1 + $0x238] sm:$0xff]
    %v85 = vld [vmem:[%s1 + $0x240] sm:$0xff]
    %v86 = vld [vmem:[%s1 + $0x248] sm:$0xff]
    %v87 = vld [vmem:[%s1 + $0x250] sm:$0xff]
    %v88 = vld [vmem:[%s1 + $0x258] sm:$0xff]
    %v89 = vld [vmem:[%s1 + $0x260] sm:$0xff]
    %v90 = vld [vmem:[%s1 + $0x268] sm:$0xff]
    %v91 = vld [vmem:[%s1 + $0x270] sm:$0xff]
    %v92 = vld [vmem:[%s1 + $0x278] sm:$0xff]
    %v93 = vld [vmem:[%s1 + $0x280] sm:$0xff]
    %v94 = vld [vmem:[%s1 + $0x288] sm:$0xff]
    %v95 = vld [vmem:[%s1 + $0x290] sm:$0xff]
    %v96 = vld [vmem:[%s1 + $0x298] sm:$0xff]
    %v97 = vld [vmem:[%s1 + $0x2a0] sm:$0xff]
    %v98 = vld [vmem:[%s1 + $0x2a8] sm:$0xff]
    %v99 = vld [vmem:[%s1 + $0x2b0] sm:$0xff]
    %v100 = vld [vmem:[%s1 + $0x2b8] sm:$0xff]
    %v101 = vld [vmem:[%s1 + $0x2c0] sm:$0xff]
    %v102 = vld [vmem:[%s1 + $0x2c8] sm:$0xff]
    %v103 = vld [vmem:[%s1 + $0x2d0] sm:$0xff]
    %v104 = vld [vmem:[%s1 + $0x2d8] sm:$0xff]
    %v105 = vld [vmem:[%s1 + $0x2e0] sm:$0xff]
    %v106 = vld [vmem:[%s1 + $0x2e8] sm:$0xff]
    %v107 = vld [vmem:[%s1 + $0x2f0] sm:$0xff]
    %v108 = vld [vmem:[%s1 + $0x2f8] sm:$0xff]
    %v109 = vld [vmem:[%s1 + $0x300] sm:$0xff]
    %v110 = vld [vmem:[%s1 + $0x308] sm:$0xff]
    %v111 = vld [vmem:[%s1 + $0x310] sm:$0xff]
    %v112 = vld [vmem:[%s1 + $0x318] sm:$0xff]
    %v113 = vld [vmem:[%s1 + $0x320] sm:$0xff]
    %v114 = vld [vmem:[%s1 + $0x328] sm:$0xff]
    %v115 = vld [vmem:[%s1 + $0x330] sm:$0xff]
    %v116 = vld [vmem:[%s1 + $0x338] sm:$0xff]
    %v117 = vld [vmem:[%s1 + $0x340] sm:$0xff]
    %v118 = vld [vmem:[%s1 + $0x348] sm:$0xff]
    %v119 = vld [vmem:[%s1 + $0x350] sm:$0xff]
    %v120 = vld [vmem:[%s1 + $0x358] sm:$0xff]
    %v121 = vld [vmem:[%s1 + $0x360] sm:$0xff]
    %v122 = vld [vmem:[%s1 + $0x368] sm:$0xff]
    %v123 = vld [vmem:[%s1 + $0x370] sm:$0xff]
    %v124 = vld [vmem:[%s1 + $0x378] sm:$0xff]
    %v125 = vld [vmem:[%s1 + $0x380] sm:$0xff]
    %v126 = vld [vmem:[%s1 + $0x388] sm:$0xff]
    %v127 = vld [vmem:[%s1 + $0x390] sm:$0xff]
    %v128 = vld [vmem:[%s1 + $0x398] sm:$0xff]
    %v129 = vld [vmem:[%s1 + $0x3a0] sm:$0xff]
    %v130 = vld [vmem:[%s1 + $0x3a8] sm:$0xff]
    %v131 = vld [vmem:[%s1 + $0x3b0] sm:$0xff]
    %v132 = vld [vmem:[%s1 + $0x3b8] sm:$0xff]
    %v133 = vld [vmem:[%s1 + $0x3c0] sm:$0xff]
    %v134 = vld [vmem:[%s1 + $0x3c8] sm:$0xff]
    %v135 = vld [vmem:[%s1 + $0x3d0] sm:$0xff]
    %v136 = vld [vmem:[%s1 + $0x3d8] sm:$0xff]
    %v137 = vld [vmem:[%s1 + $0x3e0] sm:$0xff]
    %v138 = vld [vmem:[%s1 + $0x3e8] sm:$0xff]
    %v139 = vld [vmem:[%s1 + $0x3f0] sm:$0xff]
    %v140 = vld [vmem:[%s1 + $0x3f8] sm:$0xff]
    %141 = vmatprep.subr.mxu0 0.0
    %142 = vmatpush1.xpose.msra.mxu0 %v28
    %143 = vmatprep.subr.mxu0 0.0
    %144 = vmatpush1.xpose.msra.mxu0 %v27
    %145 = vmatprep.subr.mxu0 0.0
    %146 = vmatpush1.xpose.msra.mxu0 %v26
    %147 = vmatprep.subr.mxu0 0.0
    %148 = vmatpush1.xpose.msra.mxu0 %v25
    %149 = vmatprep.subr.mxu0 0.0
    %150 = vmatpush1.xpose.msra.mxu0 %v24
    %151 = vmatprep.subr.mxu0 0.0
    %152 = vmatpush1.xpose.msra.mxu0 %v23
    %153 = vmatprep.subr.mxu0 0.0
    %154 = vmatpush1.xpose.msra.mxu0 %v22
    %155 = vmatprep.subr.mxu0 0.0
    %156 = vmatpush1.xpose.msra.mxu0 %v21
    %157 = vmatprep.subr.mxu0 0.0
    %158 = vmatpush1.xpose.msra.mxu0 %v20
    %159 = vmatprep.subr.mxu0 0.0
    %160 = vmatpush1.xpose.msra.mxu0 %v19
    %161 = vmatprep.subr.mxu0 0.0
    %162 = vmatpush1.xpose.msra.mxu0 %v18
    %163 = vmatprep.subr.mxu0 0.0
    %164 = vmatpush1.xpose.msra.mxu0 %v17
    %165 = vmatprep.subr.mxu0 0.0
    %166 = vmatpush1.xpose.msra.mxu0 %v16
    %167 = vmatprep.subr.mxu0 0.0
    %168 = vmatpush1.xpose.msra.mxu0 %v15
    %169 = vmatprep.subr.mxu0 0.0
    %170 = vmatpush1.xpose.msra.mxu0 %v14
    %171 = vmatprep.subr.mxu0 0.0
    %172 = vmatpush1.xpose.msra.mxu0 %v13
    %173 = vmatprep.subr.mxu0 0.0
    %174 = vmatpush2.xpose.msra.mxu0 %v44
    %175 = vmatprep.subr.mxu0 0.0
    %176 = vmatpush2.xpose.msra.mxu0 %v43
    %177 = vmatprep.subr.mxu0 0.0
    %178 = vmatpush2.xpose.msra.mxu0 %v42
    %179 = vmatprep.subr.mxu0 0.0
    %180 = vmatpush2.xpose.msra.mxu0 %v41
    %181 = vmatprep.subr.mxu0 0.0
    %182 = vmatpush2.xpose.msra.mxu0 %v40
    %183 = vmatprep.subr.mxu0 0.0
    %184 = vmatpush2.xpose.msra.mxu0 %v39
    %185 = vmatprep.subr.mxu0 0.0
    %186 = vmatpush2.xpose.msra.mxu0 %v38
    %187 = vmatprep.subr.mxu0 0.0
    %188 = vmatpush2.xpose.msra.mxu0 %v37
    %189 = vmatprep.subr.mxu0 0.0
    %190 = vmatpush2.xpose.msra.mxu0 %v36
    %191 = vmatprep.subr.mxu0 0.0
    %192 = vmatpush2.xpose.msra.mxu0 %v35
    %193 = vmatprep.subr.mxu0 0.0
    %194 = vmatpush2.xpose.msra.mxu0 %v34
    %195 = vmatprep.subr.mxu0 0.0
    %196 = vmatpush2.xpose.msra.mxu0 %v33
    %197 = vmatprep.subr.mxu0 0.0
    %198 = vmatpush2.xpose.msra.mxu0 %v32
    %199 = vmatprep.subr.mxu0 0.0
    %200 = vmatpush2.xpose.msra.mxu0 %v31
    %201 = vmatprep.subr.mxu0 0.0
    %202 = vmatpush2.xpose.msra.mxu0 %v30
    %203 = vmatprep.subr.mxu0 0.0
    %204 = vmatpush2.xpose.msra.mxu0 %v29
    %205 = vmatprep.mubr.f32.mxu0 0.0
    %206 = vmatmul.mubr.f32.gmra.mxu0 %v12
    %v207 = vpop.f32.mrf.mxu0
    %v208 = vadd.f32 0.0, %v207
    %v209 = vpop.f32.mrf.mxu0
    %v210 = vadd.f32 0.0, %v209
    %211 = vdwg.mxu0
    %212 = vmatprep.subr.mxu0 0.0
    %213 = vmatpush1.xpose.msra.mxu0 %v60
    %214 = vmatprep.subr.mxu0 0.0
    %215 = vmatpush1.xpose.msra.mxu0 %v59
    %216 = vmatprep.subr.mxu0 0.0
    %217 = vmatpush1.xpose.msra.mxu0 %v58
    %218 = vmatprep.subr.mxu0 0.0
    %219 = vmatpush1.xpose.msra.mxu0 %v57
    %220 = vmatprep.subr.mxu0 0.0
    %221 = vmatpush1.xpose.msra.mxu0 %v56
    %222 = vmatprep.subr.mxu0 0.0
    %223 = vmatpush1.xpose.msra.mxu0 %v55
    %224 = vmatprep.subr.mxu0 0.0
    %225 = vmatpush1.xpose.msra.mxu0 %v54
    %226 = vmatprep.subr.mxu0 0.0
    %227 = vmatpush1.xpose.msra.mxu0 %v53
    %228 = vmatprep.subr.mxu0 0.0
    %229 = vmatpush1.xpose.msra.mxu0 %v52
    %230 = vmatprep.subr.mxu0 0.0
    %231 = vmatpush1.xpose.msra.mxu0 %v51
    %232 = vmatprep.subr.mxu0 0.0
    %233 = vmatpush1.xpose.msra.mxu0 %v50
    %234 = vmatprep.subr.mxu0 0.0
    %235 = vmatpush1.xpose.msra.mxu0 %v49
    %236 = vmatprep.subr.mxu0 0.0
    %237 = vmatpush1.xpose.msra.mxu0 %v48
    %238 = vmatprep.subr.mxu0 0.0
    %239 = vmatpush1.xpose.msra.mxu0 %v47
    %240 = vmatprep.subr.mxu0 0.0
    %241 = vmatpush1.xpose.msra.mxu0 %v46
    %242 = vmatprep.subr.mxu0 0.0
    %243 = vmatpush1.xpose.msra.mxu0 %v45
    %244 = vmatprep.subr.mxu0 0.0
    %245 = vmatpush2.xpose.msra.mxu0 %v76
    %246 = vmatprep.subr.mxu0 0.0
    %247 = vmatpush2.xpose.msra.mxu0 %v75
    %248 = vmatprep.subr.mxu0 0.0
    %249 = vmatpush2.xpose.msra.mxu0 %v74
    %250 = vmatprep.subr.mxu0 0.0
    %251 = vmatpush2.xpose.msra.mxu0 %v73
    %252 = vmatprep.subr.mxu0 0.0
    %253 = vmatpush2.xpose.msra.mxu0 %v72
    %254 = vmatprep.subr.mxu0 0.0
    %255 = vmatpush2.xpose.msra.mxu0 %v71
    %256 = vmatprep.subr.mxu0 0.0
    %257 = vmatpush2.xpose.msra.mxu0 %v70
    %258 = vmatprep.subr.mxu0 0.0
    %259 = vmatpush2.xpose.msra.mxu0 %v69
    %260 = vmatprep.subr.mxu0 0.0
    %261 = vmatpush2.xpose.msra.mxu0 %v68
    %262 = vmatprep.subr.mxu0 0.0
    %263 = vmatpush2.xpose.msra.mxu0 %v67
    %264 = vmatprep.subr.mxu0 0.0
    %265 = vmatpush2.xpose.msra.mxu0 %v66
    %266 = vmatprep.subr.mxu0 0.0
    %267 = vmatpush2.xpose.msra.mxu0 %v65
    %268 = vmatprep.subr.mxu0 0.0
    %269 = vmatpush2.xpose.msra.mxu0 %v64
    %270 = vmatprep.subr.mxu0 0.0
    %271 = vmatpush2.xpose.msra.mxu0 %v63
    %272 = vmatprep.subr.mxu0 0.0
    %273 = vmatpush2.xpose.msra.mxu0 %v62
    %274 = vmatprep.subr.mxu0 0.0
    %275 = vmatpush2.xpose.msra.mxu0 %v61
    %276 = vmatprep.mubr.f32.mxu0 0.0
    %277 = vmatmul.mubr.f32.gmra.mxu0 %v12
    %v278 = vpop.f32.mrf.mxu0
    %v279 = vadd.f32 0.0, %v278
    %v280 = vpop.f32.mrf.mxu0
    %v281 = vadd.f32 0.0, %v280
    %282 = vdwg.mxu0
    %283 = vmatprep.subr.mxu0 0.0
    %284 = vmatpush1.xpose.msra.mxu0 %v92
    %285 = vmatprep.subr.mxu0 0.0
    %286 = vmatpush1.xpose.msra.mxu0 %v91
    %287 = vmatprep.subr.mxu0 0.0
    %288 = vmatpush1.xpose.msra.mxu0 %v90
    %289 = vmatprep.subr.mxu0 0.0
    %290 = vmatpush1.xpose.msra.mxu0 %v89
    %291 = vmatprep.subr.mxu0 0.0
    %292 = vmatpush1.xpose.msra.mxu0 %v88
    %293 = vmatprep.subr.mxu0 0.0
    %294 = vmatpush1.xpose.msra.mxu0 %v87
    %295 = vmatprep.subr.mxu0 0.0
    %296 = vmatpush1.xpose.msra.mxu0 %v86
    %297 = vmatprep.subr.mxu0 0.0
    %298 = vmatpush1.xpose.msra.mxu0 %v85
    %299 = vmatprep.subr.mxu0 0.0
    %300 = vmatpush1.xpose.msra.mxu0 %v84
    %301 = vmatprep.subr.mxu0 0.0
    %302 = vmatpush1.xpose.msra.mxu0 %v83
    %303 = vmatprep.subr.mxu0 0.0
    %304 = vmatpush1.xpose.msra.mxu0 %v82
    %305 = vmatprep.subr.mxu0 0.0
    %306 = vmatpush1.xpose.msra.mxu0 %v81
    %307 = vmatprep.subr.mxu0 0.0
    %308 = vmatpush1.xpose.msra.mxu0 %v80
    %309 = vmatprep.subr.mxu0 0.0
    %310 = vmatpush1.xpose.msra.mxu0 %v79
    %311 = vmatprep.subr.mxu0 0.0
    %312 = vmatpush1.xpose.msra.mxu0 %v78
    %313 = vmatprep.subr.mxu0 0.0
    %314 = vmatpush1.xpose.msra.mxu0 %v77
    %315 = vmatprep.subr.mxu0 0.0
    %316 = vmatpush2.xpose.msra.mxu0 %v108
    %317 = vmatprep.subr.mxu0 0.0
    %318 = vmatpush2.xpose.msra.mxu0 %v107
    %319 = vmatprep.subr.mxu0 0.0
    %320 = vmatpush2.xpose.msra.mxu0 %v106
    %321 = vmatprep.subr.mxu0 0.0
    %322 = vmatpush2.xpose.msra.mxu0 %v105
    %323 = vmatprep.subr.mxu0 0.0
    %324 = vmatpush2.xpose.msra.mxu0 %v104
    %325 = vmatprep.subr.mxu0 0.0
    %326 = vmatpush2.xpose.msra.mxu0 %v103
    %327 = vmatprep.subr.mxu0 0.0
    %328 = vmatpush2.xpose.msra.mxu0 %v102
    %329 = vmatprep.subr.mxu0 0.0
    %330 = vmatpush2.xpose.msra.mxu0 %v101
    %331 = vmatprep.subr.mxu0 0.0
    %332 = vmatpush2.xpose.msra.mxu0 %v100
    %333 = vmatprep.subr.mxu0 0.0
    %334 = vmatpush2.xpose.msra.mxu0 %v99
    %335 = vmatprep.subr.mxu0 0.0
    %336 = vmatpush2.xpose.msra.mxu0 %v98
    %337 = vmatprep.subr.mxu0 0.0
    %338 = vmatpush2.xpose.msra.mxu0 %v97
    %339 = vmatprep.subr.mxu0 0.0
    %340 = vmatpush2.xpose.msra.mxu0 %v96
    %341 = vmatprep.subr.mxu0 0.0
    %342 = vmatpush2.xpose.msra.mxu0 %v95
    %343 = vmatprep.subr.mxu0 0.0
    %344 = vmatpush2.xpose.msra.mxu0 %v94
    %345 = vmatprep.subr.mxu0 0.0
    %346 = vmatpush2.xpose.msra.mxu0 %v93
    %347 = vmatprep.mubr.f32.mxu0 0.0
    %348 = vmatmul.mubr.f32.gmra.mxu0 %v12
    %v349 = vpop.f32.mrf.mxu0
    %v350 = vadd.f32 0.0, %v349
    %v351 = vpop.f32.mrf.mxu0
    %v352 = vadd.f32 0.0, %v351
    %353 = vdwg.mxu0
    %354 = vmatprep.subr.mxu0 0.0
    %355 = vmatpush1.xpose.msra.mxu0 %v124
    %356 = vmatprep.subr.mxu0 0.0
    %357 = vmatpush1.xpose.msra.mxu0 %v123
    %358 = vmatprep.subr.mxu0 0.0
    %359 = vmatpush1.xpose.msra.mxu0 %v122
    %360 = vmatprep.subr.mxu0 0.0
    %361 = vmatpush1.xpose.msra.mxu0 %v121
    %362 = vmatprep.subr.mxu0 0.0
    %363 = vmatpush1.xpose.msra.mxu0 %v120
    %364 = vmatprep.subr.mxu0 0.0
    %365 = vmatpush1.xpose.msra.mxu0 %v119
    %366 = vmatprep.subr.mxu0 0.0
    %367 = vmatpush1.xpose.msra.mxu0 %v118
    %368 = vmatprep.subr.mxu0 0.0
    %369 = vmatpush1.xpose.msra.mxu0 %v117
    %370 = vmatprep.subr.mxu0 0.0
    %371 = vmatpush1.xpose.msra.mxu0 %v116
    %372 = vmatprep.subr.mxu0 0.0
    %373 = vmatpush1.xpose.msra.mxu0 %v115
    %374 = vmatprep.subr.mxu0 0.0
    %375 = vmatpush1.xpose.msra.mxu0 %v114
    %376 = vmatprep.subr.mxu0 0.0
    %377 = vmatpush1.xpose.msra.mxu0 %v113
    %378 = vmatprep.subr.mxu0 0.0
    %379 = vmatpush1.xpose.msra.mxu0 %v112
    %380 = vmatprep.subr.mxu0 0.0
    %381 = vmatpush1.xpose.msra.mxu0 %v111
    %382 = vmatprep.subr.mxu0 0.0
    %383 = vmatpush1.xpose.msra.mxu0 %v110
    %384 = vmatprep.subr.mxu0 0.0
    %385 = vmatpush1.xpose.msra.mxu0 %v109
    %386 = vmatprep.subr.mxu0 0.0
    %387 = vmatpush2.xpose.msra.mxu0 %v140
    %388 = vmatprep.subr.mxu0 0.0
    %389 = vmatpush2.xpose.msra.mxu0 %v139
    %390 = vmatprep.subr.mxu0 0.0
    %391 = vmatpush2.xpose.msra.mxu0 %v138
    %392 = vmatprep.subr.mxu0 0.0
    %393 = vmatpush2.xpose.msra.mxu0 %v137
    %394 = vmatprep.subr.mxu0 0.0
    %395 = vmatpush2.xpose.msra.mxu0 %v136
    %396 = vmatprep.subr.mxu0 0.0
    %397 = vmatpush2.xpose.msra.mxu0 %v135
    %398 = vmatprep.subr.mxu0 0.0
    %399 = vmatpush2.xpose.msra.mxu0 %v134
    %400 = vmatprep.subr.mxu0 0.0
    %401 = vmatpush2.xpose.msra.mxu0 %v133
    %402 = vmatprep.subr.mxu0 0.0
    %403 = vmatpush2.xpose.msra.mxu0 %v132
    %404 = vmatprep.subr.mxu0 0.0
    %405 = vmatpush2.xpose.msra.mxu0 %v131
    %406 = vmatprep.subr.mxu0 0.0
    %407 = vmatpush2.xpose.msra.mxu0 %v130
    %408 = vmatprep.subr.mxu0 0.0
    %409 = vmatpush2.xpose.msra.mxu0 %v129
    %410 = vmatprep.subr.mxu0 0.0
    %411 = vmatpush2.xpose.msra.mxu0 %v128
    %412 = vmatprep.subr.mxu0 0.0
    %413 = vmatpush2.xpose.msra.mxu0 %v127
    %414 = vmatprep.subr.mxu0 0.0
    %415 = vmatpush2.xpose.msra.mxu0 %v126
    %416 = vmatprep.subr.mxu0 0.0
    %417 = vmatpush2.xpose.msra.mxu0 %v125
    %418 = vmatprep.mubr.f32.mxu0 0.0
    %419 = vmatmul.mubr.f32.gmra.mxu0 %v12
    %v420 = vpop.f32.mrf.mxu0
    %v421 = vadd.f32 0.0, %v420
    %v422 = vpop.f32.mrf.mxu0
    %v423 = vadd.f32 0.0, %v422
    %424 = vdwg.mxu0
    %425 = vst [vmem:[#allocation2] sm:$0xff] %v208
    %426 = vst [vmem:[#allocation2 + $0x8] sm:$0xff] %v210
    %427 = vst [vmem:[#allocation2 + $0x10] sm:$0xff] %v279
    %428 = vst [vmem:[#allocation2 + $0x18] sm:$0xff] %v281
    %429 = vst [vmem:[#allocation2 + $0x20] sm:$0xff] %v350
    %430 = vst [vmem:[#allocation2 + $0x28] sm:$0xff] %v352
    %431 = vst [vmem:[#allocation2 + $0x30] sm:$0xff] %v421
    %432 = vst [vmem:[#allocation2 + $0x38] sm:$0xff] %v423
    // Predicated region
    $region10: #{cp_pred_pallas.1} parent=1 // pred_check
      _
    $region11: #{cp_pred_pallas.1} parent=1 // pred_check_branch
      %434 = sbr.rel (0) target = $region13
    $region12: #{cp_pred_pallas.1} parent=1 // pred_region
      %s436 = ssub.s32 1024, 1024
      %437 = vsyncadd [#allocation3], %s436
      %s439 = sshll.u32 [#allocation2], 4
      %s440 = int_to_ptr.vmem [resolvable:$true] %s439
      %442 = dma.vmem_to_hbm [thread:$0]  %s440, 1024, %s2, [#allocation3]
    $region13: #{cp_pred_pallas.1} parent=1 // pred_fallthru
      _
    // Predicated region
    $region14: #{cp_pred_pallas.1} parent=1 // pred_check
      _
    $region15: #{cp_pred_pallas.1} parent=1 // pred_check_branch
      %444 = sbr.rel (0) target = $region17
    $region16: #{cp_pred_pallas.1} parent=1 // pred_region
      %445 = dma.done [#allocation3], 1024
    $region17: #{cp_pred_pallas.1} parent=1 // pred_fallthru
      _
    %446 = vsyncpa [#allocation3], 1

</llo_original>
